<compile_context>
chip_gen: v7x
topology: tpu7x:2x2x1
jax: 0.10.0
libtpu: 0.0.40
codegen_flags: <defaults>
</compile_context>

<pallas_src>
import jax
import jax.numpy as jnp
from jax.experimental import pallas as pl
from jax.experimental.pallas import tpu as pltpu


def _round_up(x, m):
    return ((x + m - 1) // m) * m


def deterministic_policy_kernel(s_ref, w1_ref, b1_ref, w2_ref, b2_ref,
                                w3_ref, b3_ref, scale_ref, bias_ref, o_ref):
    """One (TB, .) batch tile; weights/biases are whole arrays, VMEM-resident."""
    x = s_ref[...].astype(jnp.bfloat16)

    # Linear1 + ReLU (bf16 MXU inputs, f32 accumulation)
    h1 = jnp.dot(x, w1_ref[...], preferred_element_type=jnp.float32)
    h1 = jnp.maximum(h1 + b1_ref[...], 0.0)

    # Linear2 + ReLU
    h2 = jnp.dot(h1.astype(jnp.bfloat16), w2_ref[...],
                 preferred_element_type=jnp.float32)
    h2 = jnp.maximum(h2 + b2_ref[...], 0.0)

    # Mean head: Linear3 -> tanh -> affine (action_scale / action_bias)
    m = jnp.dot(h2.astype(jnp.bfloat16), w3_ref[...],
                preferred_element_type=jnp.float32)
    m = jnp.tanh(m + b3_ref[...])
    o_ref[...] = (m * scale_ref[...] + bias_ref[...]).astype(o_ref.dtype)


def deterministic_policy_forward(state, params, *, block_b=None):
    """state: (B, num_inputs) f32. Returns (B, num_actions) f32."""
    B, num_inputs = state.shape
    H = params["w1"].shape[1]
    A = params["w3"].shape[1]

    # Lane-pad every feature dim to a multiple of 128 so all matmul operands,
    # intermediates and the final store are lane-dense.
    I_pad = _round_up(num_inputs, 128)
    H_pad = _round_up(H, 128)
    A_pad = _round_up(A, 128)

    # Batch tile: 256 rows when the batch is big (full MXU rows on v6e/v7x),
    # otherwise the batch rounded up to a multiple of 8 sublanes.
    if block_b is None:
        block_b = min(256, _round_up(B, 8))
    B_pad = _round_up(B, block_b)
    nb = B_pad // block_b

    f32 = jnp.float32
    bf16 = jnp.bfloat16

    state_p = jnp.pad(state, ((0, B_pad - B), (0, I_pad - num_inputs)))
    w1_p = jnp.pad(params["w1"].astype(bf16),
                   ((0, I_pad - num_inputs), (0, H_pad - H)))
    b1_p = jnp.pad(params["b1"].astype(f32), ((0, 0), (0, H_pad - H)))
    w2_p = jnp.pad(params["w2"].astype(bf16),
                   ((0, H_pad - H), (0, H_pad - H)))
    b2_p = jnp.pad(params["b2"].astype(f32), ((0, 0), (0, H_pad - H)))
    w3_p = jnp.pad(params["w3"].astype(bf16),
                   ((0, H_pad - H), (0, A_pad - A)))
    b3_p = jnp.pad(params["b3"].astype(f32), ((0, 0), (0, A_pad - A)))
    scale_p = jnp.pad(params["action_scale"].astype(f32),
                      ((0, 0), (0, A_pad - A)), constant_values=1.0)
    bias_p = jnp.pad(params["action_bias"].astype(f32),
                     ((0, 0), (0, A_pad - A)))

    args = (state_p, w1_p, b1_p, w2_p, b2_p, w3_p, b3_p, scale_p, bias_p)

    def resident_spec(a):
        # Whole array, same block every grid step -> stays in VMEM, no re-DMA.
        return pl.BlockSpec(a.shape, lambda i: (0,) * a.ndim)

    in_specs = [pl.BlockSpec((block_b, I_pad), lambda i: (i, 0))]
    in_specs += [resident_spec(a) for a in args[1:]]

    flops = 2 * B_pad * (I_pad * H_pad + H_pad * H_pad + H_pad * A_pad)
    bytes_accessed = (sum(int(a.size) * a.dtype.itemsize for a in args)
                      + B_pad * A_pad * 4)

    out = pl.pallas_call(
        deterministic_policy_kernel,
        out_shape=jax.ShapeDtypeStruct((B_pad, A_pad), jnp.float32),
        grid=(nb,),
        in_specs=in_specs,
        out_specs=pl.BlockSpec((block_b, A_pad), lambda i: (i, 0)),
        compiler_params=pltpu.CompilerParams(
            dimension_semantics=("parallel",)),
        cost_estimate=pl.CostEstimate(
            flops=flops,
            transcendentals=B_pad * A_pad,
            bytes_accessed=bytes_accessed),
    )(*args)
    return out[:B, :A]


def xavier_uniform(key, fan_in, fan_out, gain=1.0):
    # Matches torch.nn.init.xavier_uniform_; limit symmetric in fan_in/fan_out,
    # so the transposed (in, out) storage layout is fine.
    limit = gain * jnp.sqrt(6.0 / (fan_in + fan_out))
    return jax.random.uniform(key, (fan_in, fan_out), jnp.float32,
                              minval=-limit, maxval=limit)


def init_deterministic_policy_params(key, num_inputs, num_actions, hidden_dim,
                                     action_space=None):
    k1, k2, k3 = jax.random.split(key, 3)
    if action_space is None:
        scale = jnp.ones((1, num_actions), jnp.float32)
        bias = jnp.zeros((1, num_actions), jnp.float32)
    else:
        high, low = action_space
        scale = ((high - low) / 2.0).reshape(1, num_actions).astype(jnp.float32)
        bias = ((high + low) / 2.0).reshape(1, num_actions).astype(jnp.float32)
    return {
        # weights stored pre-transposed (in_features, out_features), bf16 (MXU-native)
        "w1": xavier_uniform(k1, num_inputs, hidden_dim).astype(jnp.bfloat16),
        "b1": jnp.zeros((1, hidden_dim), jnp.float32),
        "w2": xavier_uniform(k2, hidden_dim, hidden_dim).astype(jnp.bfloat16),
        "b2": jnp.zeros((1, hidden_dim), jnp.float32),
        "w3": xavier_uniform(k3, hidden_dim, num_actions).astype(jnp.bfloat16),
        "b3": jnp.zeros((1, num_actions), jnp.float32),
        "action_scale": scale,
        "action_bias": bias,
    }


def deterministic_policy_ref(state, params):
    """Pure-JAX reference with identical numerics (bf16 matmul, f32 accumulate)."""
    def mm(a, w):
        return jnp.dot(a.astype(jnp.bfloat16), w,
                       preferred_element_type=jnp.float32)
    h1 = jnp.maximum(mm(state, params["w1"]) + params["b1"], 0.0)
    h2 = jnp.maximum(mm(h1, params["w2"]) + params["b2"], 0.0)
    m = jnp.tanh(mm(h2, params["w3"]) + params["b3"])
    return m * params["action_scale"] + params["action_bias"]


if __name__ == "__main__":
    key = jax.random.PRNGKey(0)
    k_params, k_state = jax.random.split(key)

    batch = 2
    num_inputs = 8
    num_actions = 4
    hidden_dim = 32

    params = init_deterministic_policy_params(k_params, num_inputs,
                                              num_actions, hidden_dim)
    state = jax.random.normal(k_state, (batch, num_inputs), jnp.float32)

    out = deterministic_policy_forward(state, params)
    out = jax.block_until_ready(out)

    ref = deterministic_policy_ref(state, params)
    assert out.shape == (batch, num_actions), out.shape
    assert jnp.allclose(out, ref, atol=1e-3, rtol=1e-3)

    print("KERNEL_OK")
</pallas_src>

<mosaic_0001>
module attributes {stable_mosaic.version = 11 : i64} {
  func.func @deterministic_policy_kernel(%arg0: i32, %arg1: memref<8x128xf32, #tpu.memory_space<vmem>>, %arg2: memref<128x128xbf16, #tpu.memory_space<vmem>>, %arg3: memref<1x128xf32, #tpu.memory_space<vmem>>, %arg4: memref<128x128xbf16, #tpu.memory_space<vmem>>, %arg5: memref<1x128xf32, #tpu.memory_space<vmem>>, %arg6: memref<128x128xbf16, #tpu.memory_space<vmem>>, %arg7: memref<1x128xf32, #tpu.memory_space<vmem>>, %arg8: memref<1x128xf32, #tpu.memory_space<vmem>>, %arg9: memref<1x128xf32, #tpu.memory_space<vmem>>, %arg10: memref<8x128xf32, #tpu.memory_space<vmem>>) attributes {dimension_semantics = [#tpu.dimension_semantics<parallel>], iteration_bounds = array<i64: 1>, scalar_prefetch = 0 : i64, scratch_operands = 0 : i64, tpu.core_type = #tpu.core_type<tc>, window_params = [{transform_indices = @transform_0, window_bounds = array<i64: 8, 128>}, {pipeline_mode = #tpu.pipeline_mode<synchronous>, transform_indices = @transform_1, window_bounds = array<i64: 128, 128>}, {pipeline_mode = #tpu.pipeline_mode<synchronous>, transform_indices = @transform_2, window_bounds = array<i64: 1, 128>}, {pipeline_mode = #tpu.pipeline_mode<synchronous>, transform_indices = @transform_3, window_bounds = array<i64: 128, 128>}, {pipeline_mode = #tpu.pipeline_mode<synchronous>, transform_indices = @transform_4, window_bounds = array<i64: 1, 128>}, {pipeline_mode = #tpu.pipeline_mode<synchronous>, transform_indices = @transform_5, window_bounds = array<i64: 128, 128>}, {pipeline_mode = #tpu.pipeline_mode<synchronous>, transform_indices = @transform_6, window_bounds = array<i64: 1, 128>}, {pipeline_mode = #tpu.pipeline_mode<synchronous>, transform_indices = @transform_7, window_bounds = array<i64: 1, 128>}, {pipeline_mode = #tpu.pipeline_mode<synchronous>, transform_indices = @transform_8, window_bounds = array<i64: 1, 128>}, {transform_indices = @transform_9, window_bounds = array<i64: 8, 128>}]} {
    %c0 = arith.constant 0 : index
    %c0_0 = arith.constant 0 : index
    %0 = vector.load %arg1[%c0, %c0_0] : memref<8x128xf32, #tpu.memory_space<vmem>>, vector<8x128xf32>
    %1 = arith.truncf %0 : vector<8x128xf32> to vector<8x128xbf16>
    %c0_1 = arith.constant 0 : index
    %c0_2 = arith.constant 0 : index
    %2 = vector.load %arg2[%c0_1, %c0_2] : memref<128x128xbf16, #tpu.memory_space<vmem>>, vector<128x128xbf16>
    %cst = arith.constant dense<0.000000e+00> : vector<8x128xf32>
    %3 = tpu.matmul %1, %2, %cst {dimension_numbers = #tpu.dot_dimension_numbers<[1], [0], [0], [1], [0, 0, 1, 1], [], []>} : vector<8x128xbf16>, vector<128x128xbf16>, vector<8x128xf32> -> vector<8x128xf32>
    %c0_3 = arith.constant 0 : index
    %c0_4 = arith.constant 0 : index
    %4 = vector.load %arg3[%c0_3, %c0_4] : memref<1x128xf32, #tpu.memory_space<vmem>>, vector<1x128xf32>
    %5 = vector.broadcast %4 : vector<1x128xf32> to vector<8x128xf32>
    %6 = arith.addf %3, %5 : vector<8x128xf32>
    %cst_5 = arith.constant 0.000000e+00 : f32
    %7 = vector.broadcast %cst_5 : f32 to vector<8x128xf32>
    %8 = arith.maximumf %6, %7 : vector<8x128xf32>
    %9 = arith.truncf %8 : vector<8x128xf32> to vector<8x128xbf16>
    %c0_6 = arith.constant 0 : index
    %c0_7 = arith.constant 0 : index
    %10 = vector.load %arg4[%c0_6, %c0_7] : memref<128x128xbf16, #tpu.memory_space<vmem>>, vector<128x128xbf16>
    %cst_8 = arith.constant dense<0.000000e+00> : vector<8x128xf32>
    %11 = tpu.matmul %9, %10, %cst_8 {dimension_numbers = #tpu.dot_dimension_numbers<[1], [0], [0], [1], [0, 0, 1, 1], [], []>} : vector<8x128xbf16>, vector<128x128xbf16>, vector<8x128xf32> -> vector<8x128xf32>
    %c0_9 = arith.constant 0 : index
    %c0_10 = arith.constant 0 : index
    %12 = vector.load %arg5[%c0_9, %c0_10] : memref<1x128xf32, #tpu.memory_space<vmem>>, vector<1x128xf32>
    %13 = vector.broadcast %12 : vector<1x128xf32> to vector<8x128xf32>
    %14 = arith.addf %11, %13 : vector<8x128xf32>
    %cst_11 = arith.constant 0.000000e+00 : f32
    %15 = vector.broadcast %cst_11 : f32 to vector<8x128xf32>
    %16 = arith.maximumf %14, %15 : vector<8x128xf32>
    %17 = arith.truncf %16 : vector<8x128xf32> to vector<8x128xbf16>
    %c0_12 = arith.constant 0 : index
    %c0_13 = arith.constant 0 : index
    %18 = vector.load %arg6[%c0_12, %c0_13] : memref<128x128xbf16, #tpu.memory_space<vmem>>, vector<128x128xbf16>
    %cst_14 = arith.constant dense<0.000000e+00> : vector<8x128xf32>
    %19 = tpu.matmul %17, %18, %cst_14 {dimension_numbers = #tpu.dot_dimension_numbers<[1], [0], [0], [1], [0, 0, 1, 1], [], []>} : vector<8x128xbf16>, vector<128x128xbf16>, vector<8x128xf32> -> vector<8x128xf32>
    %c0_15 = arith.constant 0 : index
    %c0_16 = arith.constant 0 : index
    %20 = vector.load %arg7[%c0_15, %c0_16] : memref<1x128xf32, #tpu.memory_space<vmem>>, vector<1x128xf32>
    %21 = vector.broadcast %20 : vector<1x128xf32> to vector<8x128xf32>
    %22 = arith.addf %19, %21 : vector<8x128xf32>
    %23 = math.tanh %22 : vector<8x128xf32>
    %c0_17 = arith.constant 0 : index
    %c0_18 = arith.constant 0 : index
    %24 = vector.load %arg8[%c0_17, %c0_18] : memref<1x128xf32, #tpu.memory_space<vmem>>, vector<1x128xf32>
    %25 = vector.broadcast %24 : vector<1x128xf32> to vector<8x128xf32>
    %26 = arith.mulf %23, %25 : vector<8x128xf32>
    %c0_19 = arith.constant 0 : index
    %c0_20 = arith.constant 0 : index
    %27 = vector.load %arg9[%c0_19, %c0_20] : memref<1x128xf32, #tpu.memory_space<vmem>>, vector<1x128xf32>
    %28 = vector.broadcast %27 : vector<1x128xf32> to vector<8x128xf32>
    %29 = arith.addf %26, %28 : vector<8x128xf32>
    %c0_21 = arith.constant 0 : index
    %c0_22 = arith.constant 0 : index
    %30 = vector.load %arg10[%c0_21, %c0_22] : memref<8x128xf32, #tpu.memory_space<vmem>>, vector<8x128xf32>
    tpu.vector_store %arg10[%c0_21, %c0_22], %29 {strides = array<i32>} : memref<8x128xf32, #tpu.memory_space<vmem>>, vector<8x128xf32>,
    return
  }
  func.func @transform_0(%arg0: i32) -> (i32, i32) {
    %c0_i32 = arith.constant 0 : i32
    %c0_i32_0 = arith.constant 0 : i32
    return %arg0, %c0_i32 : i32, i32
  }
  func.func @transform_1(%arg0: i32) -> (i32, i32) {
    %c0_i32 = arith.constant 0 : i32
    %c0_i32_0 = arith.constant 0 : i32
    %c0_i32_1 = arith.constant 0 : i32
    return %c0_i32, %c0_i32_0 : i32, i32
  }
  func.func @transform_2(%arg0: i32) -> (i32, i32) {
    %c0_i32 = arith.constant 0 : i32
    %c0_i32_0 = arith.constant 0 : i32
    %c0_i32_1 = arith.constant 0 : i32
    return %c0_i32, %c0_i32_0 : i32, i32
  }
  func.func @transform_3(%arg0: i32) -> (i32, i32) {
    %c0_i32 = arith.constant 0 : i32
    %c0_i32_0 = arith.constant 0 : i32
    %c0_i32_1 = arith.constant 0 : i32
    return %c0_i32, %c0_i32_0 : i32, i32
  }
  func.func @transform_4(%arg0: i32) -> (i32, i32) {
    %c0_i32 = arith.constant 0 : i32
    %c0_i32_0 = arith.constant 0 : i32
    %c0_i32_1 = arith.constant 0 : i32
    return %c0_i32, %c0_i32_0 : i32, i32
  }
  func.func @transform_5(%arg0: i32) -> (i32, i32) {
    %c0_i32 = arith.constant 0 : i32
    %c0_i32_0 = arith.constant 0 : i32
    %c0_i32_1 = arith.constant 0 : i32
    return %c0_i32, %c0_i32_0 : i32, i32
  }
  func.func @transform_6(%arg0: i32) -> (i32, i32) {
    %c0_i32 = arith.constant 0 : i32
    %c0_i32_0 = arith.constant 0 : i32
    %c0_i32_1 = arith.constant 0 : i32
    return %c0_i32, %c0_i32_0 : i32, i32
  }
  func.func @transform_7(%arg0: i32) -> (i32, i32) {
    %c0_i32 = arith.constant 0 : i32
    %c0_i32_0 = arith.constant 0 : i32
    %c0_i32_1 = arith.constant 0 : i32
    return %c0_i32, %c0_i32_0 : i32, i32
  }
  func.func @transform_8(%arg0: i32) -> (i32, i32) {
    %c0_i32 = arith.constant 0 : i32
    %c0_i32_0 = arith.constant 0 : i32
    %c0_i32_1 = arith.constant 0 : i32
    return %c0_i32, %c0_i32_0 : i32, i32
  }
  func.func @transform_9(%arg0: i32) -> (i32, i32) {
    %c0_i32 = arith.constant 0 : i32
    %c0_i32_0 = arith.constant 0 : i32
    return %arg0, %c0_i32 : i32, i32
  }
}

</mosaic_0001>

<llo_original>
// kernel: tpu_custom_call.1
$region0: #{tpu_custom_call.1}
  #allocation0 [shape = 'u32[]', space=smem, size = 0x4, offset = 0x4, fixed_abs, tag = 'smem constant byte address 0x4 - core index']
  #allocation1 [shape = 'u32[144,128]{1,0:T(1,128)}', space=vmem, size = 0x12000, scoped, tag = 'internal scratch']
  %s0 = inlined_call_operand.hbm [shape: f32[8,128], index: 0, kind: input, shape index: {}]
  %s1 = inlined_call_operand.hbm [shape: bf16[128,128], index: 1, kind: input, shape index: {}]
  %s2 = inlined_call_operand.vmem [shape: f32[1,128], index: 2, kind: input, shape index: {}]
  %s3 = inlined_call_operand.hbm [shape: bf16[128,128], index: 3, kind: input, shape index: {}]
  %s4 = inlined_call_operand.vmem [shape: f32[1,128], index: 4, kind: input, shape index: {}]
  %s5 = inlined_call_operand.hbm [shape: bf16[128,128], index: 5, kind: input, shape index: {}]
  %s6 = inlined_call_operand.vmem [shape: f32[1,128], index: 6, kind: input, shape index: {}]
  %s7 = inlined_call_operand.vmem [shape: f32[1,128], index: 7, kind: input, shape index: {}]
  %s8 = inlined_call_operand.vmem [shape: f32[1,128], index: 8, kind: input, shape index: {}]
  %s9 = inlined_call_operand.hbm [shape: f32[8,128], index: 9, kind: output, shape index: {}]
  %s10 = sld [smem:[#allocation0]]
  $region62: #{tpu_custom_call.1} parent=0
    _
  %s12 = ssub.s32 1, %s10
  %s13 = scalar_select 0, %s12, %s10
  $region1: #{tpu_custom_call.1} parent=0
    #allocation2 [shape = 'u8[4096]{0}', space=vmem, size = 0x1000, scoped, tag = 'input window, operand 0, single buffered']
    #allocation3 [shape = 's32[1]{0}', space=sflag, size = 0x4, scoped, tag = 'scoped memory for tpu_custom_call.1']
    #allocation4 [shape = 's32[1]{0}', space=sflag, size = 0x4, scoped, tag = 'scoped memory for tpu_custom_call.1']
    #allocation5 [shape = 'u8[32768]{0}', space=vmem, size = 0x8000, scoped, tag = 'input window, operand 1, single buffered']
    #allocation6 [shape = 's32[1]{0}', space=sflag, size = 0x4, scoped, tag = 'scoped memory for tpu_custom_call.1']
    #allocation7 [shape = 'u8[32768]{0}', space=vmem, size = 0x8000, scoped, tag = 'input window, operand 3, single buffered']
    #allocation8 [shape = 'u8[32768]{0}', space=vmem, size = 0x8000, scoped, tag = 'input window, operand 5, single buffered']
    #allocation9 [shape = 's32[1]{0}', space=sflag, size = 0x4, scoped, tag = 'scoped memory for tpu_custom_call.1']
    #allocation10 [shape = 'u8[4096]{0}', space=vmem, size = 0x1000, scoped, tag = 'output window, operand 0, single buffered']
    %14 = vsyncpa [#allocation3], 0
    %15 = vsyncpa [#allocation6], 0
    %16 = vsyncpa [#allocation9], 0
    %17 = vsyncpa [#allocation4], 0
    // Predicated region
    $region2: #{tpu_custom_call.1} parent=1 // pred_check
      _
    $region3: #{tpu_custom_call.1} parent=1 // pred_check_branch
      %19 = sbr.rel (0) target = $region5
    $region4: #{tpu_custom_call.1} parent=1 // pred_region
      %s21 = ssub.s32 128, 128
      %22 = vsyncadd [#allocation3], %s21
      %s24 = sshll.u32 [#allocation2], 4
      %s25 = int_to_ptr.vmem [resolvable:$true] %s24
      %27 = dma.hbm_to_vmem [thread:$0]  %s0, 128, %s25, [#allocation3]
    $region5: #{tpu_custom_call.1} parent=1 // pred_fallthru
      _
    // Predicated region
    $region6: #{tpu_custom_call.1} parent=1 // pred_check
      _
    $region7: #{tpu_custom_call.1} parent=1 // pred_check_branch
      %29 = sbr.rel (0) target = $region9
    $region8: #{tpu_custom_call.1} parent=1 // pred_region
      %s31 = ssub.s32 1024, 1024
      %32 = vsyncadd [#allocation6], %s31
      %s33 = sshll.u32 [#allocation5], 4
      %s34 = int_to_ptr.vmem [resolvable:$true] %s33
      %39 = dma.hbm_to_vmem [thread:$0]  %s1, 1024, %s34, [#allocation6], 64, 64, 4
    $region9: #{tpu_custom_call.1} parent=1 // pred_fallthru
      _
    // Predicated region
    $region10: #{tpu_custom_call.1} parent=1 // pred_check
      _
    $region11: #{tpu_custom_call.1} parent=1 // pred_check_branch
      %41 = sbr.rel (0) target = $region13
    $region12: #{tpu_custom_call.1} parent=1 // pred_region
      _
    $region13: #{tpu_custom_call.1} parent=1 // pred_fallthru
      _
    // Predicated region
    $region14: #{tpu_custom_call.1} parent=1 // pred_check
      _
    $region15: #{tpu_custom_call.1} parent=1 // pred_check_branch
      %43 = sbr.rel (0) target = $region17
    $region16: #{tpu_custom_call.1} parent=1 // pred_region
      %s45 = ssub.s32 1024, 1024
      %46 = vsyncadd [#allocation6], %s45
      %s47 = sshll.u32 [#allocation7], 4
      %s48 = int_to_ptr.vmem [resolvable:$true] %s47
      %53 = dma.hbm_to_vmem [thread:$0]  %s3, 1024, %s48, [#allocation6], 64, 64, 4
    $region17: #{tpu_custom_call.1} parent=1 // pred_fallthru
      _
    // Predicated region
    $region18: #{tpu_custom_call.1} parent=1 // pred_check
      _
    $region19: #{tpu_custom_call.1} parent=1 // pred_check_branch
      %55 = sbr.rel (0) target = $region21
    $region20: #{tpu_custom_call.1} parent=1 // pred_region
      _
    $region21: #{tpu_custom_call.1} parent=1 // pred_fallthru
      _
    // Predicated region
    $region22: #{tpu_custom_call.1} parent=1 // pred_check
      _
    $region23: #{tpu_custom_call.1} parent=1 // pred_check_branch
      %57 = sbr.rel (0) target = $region25
    $region24: #{tpu_custom_call.1} parent=1 // pred_region
      %s59 = ssub.s32 1024, 1024
      %60 = vsyncadd [#allocation9], %s59
      %s61 = sshll.u32 [#allocation8], 4
      %s62 = int_to_ptr.vmem [resolvable:$true] %s61
      %67 = dma.hbm_to_vmem [thread:$0]  %s5, 1024, %s62, [#allocation9], 64, 64, 4
    $region25: #{tpu_custom_call.1} parent=1 // pred_fallthru
      _
    // Predicated region
    $region26: #{tpu_custom_call.1} parent=1 // pred_check
      _
    $region27: #{tpu_custom_call.1} parent=1 // pred_check_branch
      %69 = sbr.rel (0) target = $region29
    $region28: #{tpu_custom_call.1} parent=1 // pred_region
      _
    $region29: #{tpu_custom_call.1} parent=1 // pred_fallthru
      _
    // Predicated region
    $region30: #{tpu_custom_call.1} parent=1 // pred_check
      _
    $region31: #{tpu_custom_call.1} parent=1 // pred_check_branch
      %71 = sbr.rel (0) target = $region33
    $region32: #{tpu_custom_call.1} parent=1 // pred_region
      _
    $region33: #{tpu_custom_call.1} parent=1 // pred_fallthru
      _
    // Predicated region
    $region34: #{tpu_custom_call.1} parent=1 // pred_check
      _
    $region35: #{tpu_custom_call.1} parent=1 // pred_check_branch
      %73 = sbr.rel (0) target = $region37
    $region36: #{tpu_custom_call.1} parent=1 // pred_region
      _
    $region37: #{tpu_custom_call.1} parent=1 // pred_fallthru
      _
    // Predicated region
    $region38: #{tpu_custom_call.1} parent=1 // pred_check
      _
    $region39: #{tpu_custom_call.1} parent=1 // pred_check_branch
      %75 = sbr.rel (0) target = $region41
    $region40: #{tpu_custom_call.1} parent=1 // pred_region
      %76 = dma.done [#allocation3], 128
    $region41: #{tpu_custom_call.1} parent=1 // pred_fallthru
      _
    // Predicated region
    $region42: #{tpu_custom_call.1} parent=1 // pred_check
      _
    $region43: #{tpu_custom_call.1} parent=1 // pred_check_branch
      %78 = sbr.rel (0) target = $region45
    $region44: #{tpu_custom_call.1} parent=1 // pred_region
      %79 = dma.done [#allocation6], 1024
    $region45: #{tpu_custom_call.1} parent=1 // pred_fallthru
      _
    // Predicated region
    $region46: #{tpu_custom_call.1} parent=1 // pred_check
      _
    $region47: #{tpu_custom_call.1} parent=1 // pred_check_branch
      %81 = sbr.rel (0) target = $region49
    $region48: #{tpu_custom_call.1} parent=1 // pred_region
      %82 = dma.done [#allocation6], 1024
    $region49: #{tpu_custom_call.1} parent=1 // pred_fallthru
      _
    // Predicated region
    $region50: #{tpu_custom_call.1} parent=1 // pred_check
      _
    $region51: #{tpu_custom_call.1} parent=1 // pred_check_branch
      %84 = sbr.rel (0) target = $region53
    $region52: #{tpu_custom_call.1} parent=1 // pred_region
      %85 = dma.done [#allocation9], 1024
    $region53: #{tpu_custom_call.1} parent=1 // pred_fallthru
      _
    %v87 = vld [vmem:[#allocation2] sm:$0xff]
    %v88 = vpack.c.bf16 %v87, %v87
    %v89 = vld [vmem:[#allocation5] sm:$0xf]
    %v90 = vld [vmem:[#allocation5 + $0x4] sm:$0xf]
    %v91 = vld [vmem:[#allocation5 + $0x8] sm:$0xf]
    %v92 = vld [vmem:[#allocation5 + $0xc] sm:$0xf]
    %v93 = vld [vmem:[#allocation5 + $0x10] sm:$0xf]
    %v94 = vld [vmem:[#allocation5 + $0x14] sm:$0xf]
    %v95 = vld [vmem:[#allocation5 + $0x18] sm:$0xf]
    %v96 = vld [vmem:[#allocation5 + $0x1c] sm:$0xf]
    %v97 = vld [vmem:[#allocation5 + $0x20] sm:$0xf]
    %v98 = vld [vmem:[#allocation5 + $0x24] sm:$0xf]
    %v99 = vld [vmem:[#allocation5 + $0x28] sm:$0xf]
    %v100 = vld [vmem:[#allocation5 + $0x2c] sm:$0xf]
    %v101 = vld [vmem:[#allocation5 + $0x30] sm:$0xf]
    %v102 = vld [vmem:[#allocation5 + $0x34] sm:$0xf]
    %v103 = vld [vmem:[#allocation5 + $0x38] sm:$0xf]
    %v104 = vld [vmem:[#allocation5 + $0x3c] sm:$0xf]
    %v105 = vld [vmem:[%s2] sm:$0x1]
    %v107 = vlaneseq
    %v108 = vshrl.u32 %v107, 7
    %v109 = vsub.s32 0, %v108
    %v110 = vrot.slane %v105, %v109
    %v128 = vunpack.c.l.b16 %v89
    %v129 = vunpack.c.l.b16 %v90
    %v130 = vunpack.c.l.b16 %v91
    %v131 = vunpack.c.l.b16 %v92
    %v132 = vunpack.c.l.b16 %v93
    %v133 = vunpack.c.l.b16 %v94
    %v134 = vunpack.c.l.b16 %v95
    %v135 = vunpack.c.l.b16 %v96
    %v136 = vunpack.c.l.b16 %v97
    %v137 = vunpack.c.l.b16 %v98
    %v138 = vunpack.c.l.b16 %v99
    %v139 = vunpack.c.l.b16 %v100
    %v140 = vunpack.c.l.b16 %v101
    %v141 = vunpack.c.l.b16 %v102
    %v142 = vunpack.c.l.b16 %v103
    %v143 = vunpack.c.l.b16 %v104
    %v144 = vpack.c.b16 %v129, %v128
    %v145 = vpack.c.b16 %v131, %v130
    %v146 = vpack.c.b16 %v133, %v132
    %v147 = vpack.c.b16 %v135, %v134
    %v148 = vpack.c.b16 %v137, %v136
    %v149 = vpack.c.b16 %v139, %v138
    %v150 = vpack.c.b16 %v141, %v140
    %v151 = vpack.c.b16 %v143, %v142
    %160 = vmatprep.subr.bf16.mxu0 0
    %161 = vmatpush1.bf16.msra.mxu0 %v144
    %162 = vmatprep.subr.bf16.mxu0 0
    %163 = vmatpush1.bf16.msra.mxu0 %v145
    %164 = vmatprep.subr.bf16.mxu0 0
    %165 = vmatpush1.bf16.msra.mxu0 %v146
    %166 = vmatprep.subr.bf16.mxu0 0
    %167 = vmatpush1.bf16.msra.mxu0 %v147
    %168 = vmatprep.subr.bf16.mxu0 0
    %169 = vmatpush1.bf16.msra.mxu0 %v148
    %170 = vmatprep.subr.bf16.mxu0 0
    %171 = vmatpush1.bf16.msra.mxu0 %v149
    %172 = vmatprep.subr.bf16.mxu0 0
    %173 = vmatpush1.bf16.msra.mxu0 %v150
    %174 = vmatprep.subr.bf16.mxu0 0
    %175 = vmatpush1.bf16.msra.mxu0 %v151
    %176 = vmatprep.subr.bf16.mxu0 0
    %177 = vmatpush1.bf16.msra.mxu0 0
    %178 = vmatprep.subr.bf16.mxu0 0
    %179 = vmatpush1.bf16.msra.mxu0 0
    %180 = vmatprep.subr.bf16.mxu0 0
    %181 = vmatpush1.bf16.msra.mxu0 0
    %182 = vmatprep.subr.bf16.mxu0 0
    %183 = vmatpush1.bf16.msra.mxu0 0
    %184 = vmatprep.subr.bf16.mxu0 0
    %185 = vmatpush1.bf16.msra.mxu0 0
    %186 = vmatprep.subr.bf16.mxu0 0
    %187 = vmatpush1.bf16.msra.mxu0 0
    %188 = vmatprep.subr.bf16.mxu0 0
    %189 = vmatpush1.bf16.msra.mxu0 0
    %190 = vmatprep.subr.bf16.mxu0 0
    %191 = vmatpush1.bf16.msra.mxu0 0
    %192 = vmatprep.mubr.bf16.mxu0 0
    %193 = vmatmul.mubr.bf16.gmra.mrb[0].mxu0 %v88
    %v194 = vpop.f32.mrb[0].mxu0
    %v195 = vadd.f32 %v110, %v194
    %v196 = vpop.f32.mrb[0].mxu0
    %v197 = vpop.f32.mrb[0].mxu0
    %v198 = vpop.f32.mrb[0].mxu0
    %199 = vdwg.mxu0
    %v200 = vmax.f32 %v195, 0.0
    %v201 = vpack.c.bf16 %v200, %v200
    %v202 = vld [vmem:[#allocation7] sm:$0xf]
    %v203 = vld [vmem:[#allocation7 + $0x4] sm:$0xf]
    %v204 = vld [vmem:[#allocation7 + $0x8] sm:$0xf]
    %v205 = vld [vmem:[#allocation7 + $0xc] sm:$0xf]
    %v206 = vld [vmem:[#allocation7 + $0x10] sm:$0xf]
    %v207 = vld [vmem:[#allocation7 + $0x14] sm:$0xf]
    %v208 = vld [vmem:[#allocation7 + $0x18] sm:$0xf]
    %v209 = vld [vmem:[#allocation7 + $0x1c] sm:$0xf]
    %v210 = vld [vmem:[#allocation7 + $0x20] sm:$0xf]
    %v211 = vld [vmem:[#allocation7 + $0x24] sm:$0xf]
    %v212 = vld [vmem:[#allocation7 + $0x28] sm:$0xf]
    %v213 = vld [vmem:[#allocation7 + $0x2c] sm:$0xf]
    %v214 = vld [vmem:[#allocation7 + $0x30] sm:$0xf]
    %v215 = vld [vmem:[#allocation7 + $0x34] sm:$0xf]
    %v216 = vld [vmem:[#allocation7 + $0x38] sm:$0xf]
    %v217 = vld [vmem:[#allocation7 + $0x3c] sm:$0xf]
    %v218 = vld [vmem:[%s4] sm:$0x1]
    %v220 = vlaneseq
    %v221 = vshrl.u32 %v220, 7
    %v222 = vsub.s32 0, %v221
    %v223 = vrot.slane %v218, %v222
    %v241 = vunpack.c.l.b16 %v202
    %v242 = vunpack.c.l.b16 %v203
    %v243 = vunpack.c.l.b16 %v204
    %v244 = vunpack.c.l.b16 %v205
    %v245 = vunpack.c.l.b16 %v206
    %v246 = vunpack.c.l.b16 %v207
    %v247 = vunpack.c.l.b16 %v208
    %v248 = vunpack.c.l.b16 %v209
    %v249 = vunpack.c.l.b16 %v210
    %v250 = vunpack.c.l.b16 %v211
    %v251 = vunpack.c.l.b16 %v212
    %v252 = vunpack.c.l.b16 %v213
    %v253 = vunpack.c.l.b16 %v214
    %v254 = vunpack.c.l.b16 %v215
    %v255 = vunpack.c.l.b16 %v216
    %v256 = vunpack.c.l.b16 %v217
    %v257 = vpack.c.b16 %v242, %v241
    %v258 = vpack.c.b16 %v244, %v243
    %v259 = vpack.c.b16 %v246, %v245
    %v260 = vpack.c.b16 %v248, %v247
    %v261 = vpack.c.b16 %v250, %v249
    %v262 = vpack.c.b16 %v252, %v251
    %v263 = vpack.c.b16 %v254, %v253
    %v264 = vpack.c.b16 %v256, %v255
    %273 = vmatprep.subr.bf16.mxu0 0
    %274 = vmatpush1.bf16.msra.mxu0 %v257
    %275 = vmatprep.subr.bf16.mxu0 0
    %276 = vmatpush1.bf16.msra.mxu0 %v258
    %277 = vmatprep.subr.bf16.mxu0 0
    %278 = vmatpush1.bf16.msra.mxu0 %v259
    %279 = vmatprep.subr.bf16.mxu0 0
    %280 = vmatpush1.bf16.msra.mxu0 %v260
    %281 = vmatprep.subr.bf16.mxu0 0
    %282 = vmatpush1.bf16.msra.mxu0 %v261
    %283 = vmatprep.subr.bf16.mxu0 0
    %284 = vmatpush1.bf16.msra.mxu0 %v262
    %285 = vmatprep.subr.bf16.mxu0 0
    %286 = vmatpush1.bf16.msra.mxu0 %v263
    %287 = vmatprep.subr.bf16.mxu0 0
    %288 = vmatpush1.bf16.msra.mxu0 %v264
    %289 = vmatprep.subr.bf16.mxu0 0
    %290 = vmatpush1.bf16.msra.mxu0 0
    %291 = vmatprep.subr.bf16.mxu0 0
    %292 = vmatpush1.bf16.msra.mxu0 0
    %293 = vmatprep.subr.bf16.mxu0 0
    %294 = vmatpush1.bf16.msra.mxu0 0
    %295 = vmatprep.subr.bf16.mxu0 0
    %296 = vmatpush1.bf16.msra.mxu0 0
    %297 = vmatprep.subr.bf16.mxu0 0
    %298 = vmatpush1.bf16.msra.mxu0 0
    %299 = vmatprep.subr.bf16.mxu0 0
    %300 = vmatpush1.bf16.msra.mxu0 0
    %301 = vmatprep.subr.bf16.mxu0 0
    %302 = vmatpush1.bf16.msra.mxu0 0
    %303 = vmatprep.subr.bf16.mxu0 0
    %304 = vmatpush1.bf16.msra.mxu0 0
    %305 = vmatprep.mubr.bf16.mxu0 0
    %306 = vmatmul.mubr.bf16.gmra.mrb[0].mxu0 %v201
    %v307 = vpop.f32.mrb[0].mxu0
    %v308 = vadd.f32 %v223, %v307
    %v309 = vpop.f32.mrb[0].mxu0
    %v310 = vpop.f32.mrb[0].mxu0
    %v311 = vpop.f32.mrb[0].mxu0
    %312 = vdwg.mxu0
    %v313 = vmax.f32 %v308, 0.0
    %v314 = vpack.c.bf16 %v313, %v313
    %v315 = vld [vmem:[#allocation8] sm:$0xf]
    %v316 = vld [vmem:[#allocation8 + $0x4] sm:$0xf]
    %v317 = vld [vmem:[#allocation8 + $0x8] sm:$0xf]
    %v318 = vld [vmem:[#allocation8 + $0xc] sm:$0xf]
    %v319 = vld [vmem:[#allocation8 + $0x10] sm:$0xf]
    %v320 = vld [vmem:[#allocation8 + $0x14] sm:$0xf]
    %v321 = vld [vmem:[#allocation8 + $0x18] sm:$0xf]
    %v322 = vld [vmem:[#allocation8 + $0x1c] sm:$0xf]
    %v323 = vld [vmem:[#allocation8 + $0x20] sm:$0xf]
    %v324 = vld [vmem:[#allocation8 + $0x24] sm:$0xf]
    %v325 = vld [vmem:[#allocation8 + $0x28] sm:$0xf]
    %v326 = vld [vmem:[#allocation8 + $0x2c] sm:$0xf]
    %v327 = vld [vmem:[#allocation8 + $0x30] sm:$0xf]
    %v328 = vld [vmem:[#allocation8 + $0x34] sm:$0xf]
    %v329 = vld [vmem:[#allocation8 + $0x38] sm:$0xf]
    %v330 = vld [vmem:[#allocation8 + $0x3c] sm:$0xf]
    %v331 = vld [vmem:[%s6] sm:$0x1]
    %v333 = vlaneseq
    %v334 = vshrl.u32 %v333, 7
    %v335 = vsub.s32 0, %v334
    %v336 = vrot.slane %v331, %v335
    %v354 = vunpack.c.l.b16 %v315
    %v355 = vunpack.c.l.b16 %v316
    %v356 = vunpack.c.l.b16 %v317
    %v357 = vunpack.c.l.b16 %v318
    %v358 = vunpack.c.l.b16 %v319
    %v359 = vunpack.c.l.b16 %v320
    %v360 = vunpack.c.l.b16 %v321
    %v361 = vunpack.c.l.b16 %v322
    %v362 = vunpack.c.l.b16 %v323
    %v363 = vunpack.c.l.b16 %v324
    %v364 = vunpack.c.l.b16 %v325
    %v365 = vunpack.c.l.b16 %v326
    %v366 = vunpack.c.l.b16 %v327
    %v367 = vunpack.c.l.b16 %v328
    %v368 = vunpack.c.l.b16 %v329
    %v369 = vunpack.c.l.b16 %v330
    %v370 = vpack.c.b16 %v355, %v354
    %v371 = vpack.c.b16 %v357, %v356
    %v372 = vpack.c.b16 %v359, %v358
    %v373 = vpack.c.b16 %v361, %v360
    %v374 = vpack.c.b16 %v363, %v362
    %v375 = vpack.c.b16 %v365, %v364
    %v376 = vpack.c.b16 %v367, %v366
    %v377 = vpack.c.b16 %v369, %v368
    %386 = vmatprep.subr.bf16.mxu0 0
    %387 = vmatpush1.bf16.msra.mxu0 %v370
    %388 = vmatprep.subr.bf16.mxu0 0
    %389 = vmatpush1.bf16.msra.mxu0 %v371
    %390 = vmatprep.subr.bf16.mxu0 0
    %391 = vmatpush1.bf16.msra.mxu0 %v372
    %392 = vmatprep.subr.bf16.mxu0 0
    %393 = vmatpush1.bf16.msra.mxu0 %v373
    %394 = vmatprep.subr.bf16.mxu0 0
    %395 = vmatpush1.bf16.msra.mxu0 %v374
    %396 = vmatprep.subr.bf16.mxu0 0
    %397 = vmatpush1.bf16.msra.mxu0 %v375
    %398 = vmatprep.subr.bf16.mxu0 0
    %399 = vmatpush1.bf16.msra.mxu0 %v376
    %400 = vmatprep.subr.bf16.mxu0 0
    %401 = vmatpush1.bf16.msra.mxu0 %v377
    %402 = vmatprep.subr.bf16.mxu0 0
    %403 = vmatpush1.bf16.msra.mxu0 0
    %404 = vmatprep.subr.bf16.mxu0 0
    %405 = vmatpush1.bf16.msra.mxu0 0
    %406 = vmatprep.subr.bf16.mxu0 0
    %407 = vmatpush1.bf16.msra.mxu0 0
    %408 = vmatprep.subr.bf16.mxu0 0
    %409 = vmatpush1.bf16.msra.mxu0 0
    %410 = vmatprep.subr.bf16.mxu0 0
    %411 = vmatpush1.bf16.msra.mxu0 0
    %412 = vmatprep.subr.bf16.mxu0 0
    %413 = vmatpush1.bf16.msra.mxu0 0
    %414 = vmatprep.subr.bf16.mxu0 0
    %415 = vmatpush1.bf16.msra.mxu0 0
    %416 = vmatprep.subr.bf16.mxu0 0
    %417 = vmatpush1.bf16.msra.mxu0 0
    %418 = vmatprep.mubr.bf16.mxu0 0
    %419 = vmatmul.mubr.bf16.gmra.mrb[0].mxu0 %v314
    %v420 = vpop.f32.mrb[0].mxu0
    %v421 = vadd.f32 %v336, %v420
    %v422 = vpop.f32.mrb[0].mxu0
    %v423 = vpop.f32.mrb[0].mxu0
    %v424 = vpop.f32.mrb[0].mxu0
    %425 = vdwg.mxu0
    %v426 = vtanh.pop %v421
    %v427 = vld [vmem:[%s7] sm:$0x1]
    %v429 = vlaneseq
    %v430 = vshrl.u32 %v429, 7
    %v431 = vsub.s32 0, %v430
    %v432 = vrot.slane %v427, %v431
    %v434 = vmul.f32 %v426, %v432
    %v435 = vld [vmem:[%s8] sm:$0x1]
    %v437 = vlaneseq
    %v438 = vshrl.u32 %v437, 7
    %v439 = vsub.s32 0, %v438
    %v440 = vrot.slane %v435, %v439
    %v442 = vadd.f32 %v434, %v440
    %443 = vst [vmem:[#allocation10] sm:$0xff] %v442
    // Predicated region
    $region54: #{tpu_custom_call.1} parent=1 // pred_check
      _
    $region55: #{tpu_custom_call.1} parent=1 // pred_check_branch
      %445 = sbr.rel (0) target = $region57
    $region56: #{tpu_custom_call.1} parent=1 // pred_region
      %s447 = ssub.s32 128, 128
      %448 = vsyncadd [#allocation4], %s447
      %s450 = sshll.u32 [#allocation10], 4
      %s451 = int_to_ptr.vmem [resolvable:$true] %s450
      %453 = dma.vmem_to_hbm [thread:$0]  %s451, 128, %s9, [#allocation4]
    $region57: #{tpu_custom_call.1} parent=1 // pred_fallthru
      _
    // Predicated region
    $region58: #{tpu_custom_call.1} parent=1 // pred_check
      _
    $region59: #{tpu_custom_call.1} parent=1 // pred_check_branch
      %455 = sbr.rel (0) target = $region61
    $region60: #{tpu_custom_call.1} parent=1 // pred_region
      %456 = dma.done [#allocation4], 128
    $region61: #{tpu_custom_call.1} parent=1 // pred_fallthru
      _
    %457 = vsyncpa [#allocation3], 1
    %458 = vsyncpa [#allocation6], 1
    %459 = vsyncpa [#allocation9], 1
    %460 = vsyncpa [#allocation4], 1

</llo_original>
